<compile_context>
chip_gen: v7x
topology: tpu7x:2x2x1
jax: 0.10.0
libtpu: 0.0.40
codegen_flags: <defaults>
</compile_context>

<pallas_src>
import jax
import jax.numpy as jnp
from jax.experimental import pallas as pl
from jax.experimental.pallas import tpu as pltpu

HIDDEN = 1024        # forward reshapes cls to (B, 32, 32) => hidden_size must be 1024
LABEL_NUM = 4        # sentiment labels per aspect head
NUM_HEADS = 11       # fc0 .. fc10
BATCH = 2
OUT_COLS = NUM_HEADS * LABEL_NUM   # 44 real output columns (group boundaries align to 4)
OUT_LANES = 128                    # lane-dense padded output width (unmasked vst)

# TODO(synk): the pretrained BERT encoder (transformers.BertModel) is not implemented;
# the kernel takes the pooled [CLS] embedding (outputs[1]) as its input.
# TODO(synk): nn.Dropout is identity at inference time and is treated as such.
# NOTE: the reference forward computes 11 ScaledDotProductAttention(q_i, cls, cls) results but
# then discards them (it reshapes `cls`, not `cls_i`, into cls0..cls10), so attention does NOT
# affect the output and is intentionally omitted here.


def _segmented_reduce_4(v, op, lane):
    """Reduce within each aligned group of 4 consecutive lanes; every lane of a group ends up
    holding the group's reduction result. 4 XLU rolls + 2 selects + 2 op's, all full-vreg.
    Group boundaries (multiples of 4) are never crossed, so the lane-dim wraparound is harmless."""
    n = v.shape[-1]
    # step 1: combine each lane with its pair partner (lane ^ 1)
    fwd1 = pltpu.roll(v, shift=n - 1, axis=1)   # fwd1[i] = v[i + 1]
    bwd1 = pltpu.roll(v, shift=1, axis=1)       # bwd1[i] = v[i - 1]
    v = op(v, jnp.where((lane & 1) == 0, fwd1, bwd1))
    # step 2: combine each pair with the other pair of its group (lane ^ 2)
    fwd2 = pltpu.roll(v, shift=n - 2, axis=1)   # fwd2[i] = v[i + 2]
    bwd2 = pltpu.roll(v, shift=2, axis=1)       # bwd2[i] = v[i - 2]
    return op(v, jnp.where((lane & 3) < 2, fwd2, bwd2))


def _multilabel_head_kernel(x_ref, w_ref, b_ref, out_ref):
    # x_ref  : [B, H]   f32  pooled cls embedding
    # w_ref  : [H, 128] bf16 folded head weight W' = W_init @ concat(W_fc), zero-padded 44 -> 128
    # b_ref  : [1, 128] f32  folded head bias   b' = b_init @ concat(W_fc) + concat(b_fc), padded
    # out_ref: [B, 128] f32  log-softmax slab (4 columns per head); columns >= 44 are discarded
    x = x_ref[...].astype(jnp.bfloat16)                      # cast on-chip; MXU is native bf16
    logits = jnp.dot(x, w_ref[...], preferred_element_type=jnp.float32) + b_ref[...]  # f32 [B,128]
    lane = jax.lax.broadcasted_iota(jnp.int32, logits.shape, 1)
    m = _segmented_reduce_4(logits, jnp.maximum, lane)       # per-group max (stability), f32
    z = logits - m
    s = _segmented_reduce_4(jnp.exp(z), jnp.add, lane)       # per-group sum(exp), f32
    out_ref[...] = (z - jnp.log(s)).astype(out_ref.dtype)    # single unmasked 128-lane-wide store


def prepare_folded_params(w_init, b_init, w_fc, b_fc):
    """One-time weight preparation. Call ONCE at setup; never on the per-example path."""
    n_heads, h, l = w_fc.shape
    w_cat = jnp.transpose(w_fc, (1, 0, 2)).reshape(h, n_heads * l)                # [H, 44]
    b_cat = b_fc.reshape(1, n_heads * l)                                          # [1, 44]
    w_fold = jnp.dot(w_init, w_cat, preferred_element_type=jnp.float32)           # [H, 44]
    b_fold = jnp.dot(b_init, w_cat, preferred_element_type=jnp.float32) + b_cat   # [1, 44]
    pad = OUT_LANES - n_heads * l
    w_fold = jnp.pad(w_fold, ((0, 0), (0, pad))).astype(jnp.bfloat16)             # [H, 128] bf16
    b_fold = jnp.pad(b_fold, ((0, 0), (0, pad)))                                  # [1, 128] f32
    return w_fold, b_fold


@jax.jit
def bert_multilabel_cls_head(cls_pooled, w_fold, b_fold):
    B, H = cls_pooled.shape
    vmem = pl.BlockSpec(memory_space=pltpu.MemorySpace.VMEM)
    cost = pl.CostEstimate(
        flops=2 * B * H * OUT_LANES,
        transcendentals=2 * B * OUT_LANES,                     # exp + log per output lane
        bytes_accessed=B * H * 4 + H * OUT_LANES * 2 + OUT_LANES * 4 + B * OUT_LANES * 4,
    )
    # Total VMEM footprint ~0.3 MiB: no grid, no vmem_limit override needed on any generation.
    out = pl.pallas_call(
        _multilabel_head_kernel,
        out_shape=jax.ShapeDtypeStruct((B, OUT_LANES), jnp.float32),
        in_specs=[vmem, vmem, vmem],
        out_specs=vmem,
        cost_estimate=cost,
    )(cls_pooled, w_fold, b_fold)
    return out[:, :OUT_COLS].reshape(B, NUM_HEADS, LABEL_NUM)


def _reference(cls_pooled, w_init, b_init, w_fc, b_fc):
    h = cls_pooled @ w_init + b_init[0]
    outs = []
    for i in range(NUM_HEADS):
        logits = h @ w_fc[i] + b_fc[i, 0]
        outs.append(jax.nn.log_softmax(logits, axis=-1))
    return jnp.stack(outs, axis=1)


if __name__ == "__main__":
    key = jax.random.PRNGKey(0)
    k_x, k_wi, k_bi, k_wf, k_bf = jax.random.split(key, 5)

    # Deterministic synthetic parameters (shapes from module __init__).
    cls_pooled = jax.random.normal(k_x, (BATCH, HIDDEN), jnp.float32)
    w_init = 0.02 * jax.random.normal(k_wi, (HIDDEN, HIDDEN), jnp.float32)
    b_init = 0.02 * jax.random.normal(k_bi, (1, HIDDEN), jnp.float32)
    w_fc = 0.02 * jax.random.normal(k_wf, (NUM_HEADS, HIDDEN, LABEL_NUM), jnp.float32)
    b_fc = 0.02 * jax.random.normal(k_bf, (NUM_HEADS, 1, LABEL_NUM), jnp.float32)

    # One-time prepare step (hoisted off the per-call path).
    w_fold, b_fold = jax.block_until_ready(prepare_folded_params(w_init, b_init, w_fc, b_fc))

    out = bert_multilabel_cls_head(cls_pooled, w_fold, b_fold)
    out = jax.block_until_ready(out)
    assert out.shape == (BATCH, NUM_HEADS, LABEL_NUM)

    ref = _reference(cls_pooled, w_init, b_init, w_fc, b_fc)
    # bf16 MXU operands (f32 accumulate / f32 softmax) => slightly looser tolerance than pure f32.
    assert jnp.allclose(out, ref, atol=2e-2, rtol=2e-2), "kernel mismatch vs reference"

    print("KERNEL_OK")
</pallas_src>

<mosaic_0001>
module attributes {stable_mosaic.version = 11 : i64} {
  func.func @_multilabel_head_kernel(%arg0: memref<2x1024xf32, #tpu.memory_space<vmem>>, %arg1: memref<1024x128xbf16, #tpu.memory_space<vmem>>, %arg2: memref<1x128xf32, #tpu.memory_space<vmem>>, %arg3: memref<2x128xf32, #tpu.memory_space<vmem>>) attributes {dimension_semantics = [], scalar_prefetch = 0 : i64, scratch_operands = 0 : i64, tpu.core_type = #tpu.core_type<tc>} {
    %c0 = arith.constant 0 : index
    %c0_0 = arith.constant 0 : index
    %0 = vector.load %arg0[%c0, %c0_0] : memref<2x1024xf32, #tpu.memory_space<vmem>>, vector<2x1024xf32>
    %1 = arith.truncf %0 : vector<2x1024xf32> to vector<2x1024xbf16>
    %c0_1 = arith.constant 0 : index
    %c0_2 = arith.constant 0 : index
    %2 = vector.load %arg1[%c0_1, %c0_2] : memref<1024x128xbf16, #tpu.memory_space<vmem>>, vector<1024x128xbf16>
    %cst = arith.constant dense<0.000000e+00> : vector<2x128xf32>
    %3 = tpu.matmul %1, %2, %cst {dimension_numbers = #tpu.dot_dimension_numbers<[1], [0], [0], [1], [0, 0, 1, 1], [], []>} : vector<2x1024xbf16>, vector<1024x128xbf16>, vector<2x128xf32> -> vector<2x128xf32>
    %c0_3 = arith.constant 0 : index
    %c0_4 = arith.constant 0 : index
    %4 = vector.load %arg2[%c0_3, %c0_4] : memref<1x128xf32, #tpu.memory_space<vmem>>, vector<1x128xf32>
    %5 = vector.broadcast %4 : vector<1x128xf32> to vector<2x128xf32>
    %6 = arith.addf %3, %5 : vector<2x128xf32>
    %7 = tpu.iota {dimensions = array<i32: 1>} : vector<2x128xi32>
    %c127_i32 = arith.constant 127 : i32
    %8 = tpu.dynamic_rotate %6 by %c127_i32 dim 1 : vector<2x128xf32>, i32 -> vector<2x128xf32>
    %c1_i32 = arith.constant 1 : i32
    %9 = tpu.dynamic_rotate %6 by %c1_i32 dim 1 : vector<2x128xf32>, i32 -> vector<2x128xf32>
    %c1_i32_5 = arith.constant 1 : i32
    %10 = vector.broadcast %c1_i32_5 : i32 to vector<2x128xi32>
    %11 = arith.andi %7, %10 : vector<2x128xi32>
    %c0_i32 = arith.constant 0 : i32
    %12 = vector.broadcast %c0_i32 : i32 to vector<2x128xi32>
    %13 = arith.cmpi eq, %11, %12 : vector<2x128xi32>
    %14 = arith.select %13, %8, %9 : vector<2x128xi1>, vector<2x128xf32>
    %15 = arith.maximumf %6, %14 : vector<2x128xf32>
    %c126_i32 = arith.constant 126 : i32
    %16 = tpu.dynamic_rotate %15 by %c126_i32 dim 1 : vector<2x128xf32>, i32 -> vector<2x128xf32>
    %c2_i32 = arith.constant 2 : i32
    %17 = tpu.dynamic_rotate %15 by %c2_i32 dim 1 : vector<2x128xf32>, i32 -> vector<2x128xf32>
    %c3_i32 = arith.constant 3 : i32
    %18 = vector.broadcast %c3_i32 : i32 to vector<2x128xi32>
    %19 = arith.andi %7, %18 : vector<2x128xi32>
    %c2_i32_6 = arith.constant 2 : i32
    %20 = vector.broadcast %c2_i32_6 : i32 to vector<2x128xi32>
    %21 = arith.cmpi slt, %19, %20 : vector<2x128xi32>
    %22 = arith.select %21, %16, %17 : vector<2x128xi1>, vector<2x128xf32>
    %23 = arith.maximumf %15, %22 : vector<2x128xf32>
    %24 = arith.subf %6, %23 : vector<2x128xf32>
    %25 = math.exp %24 : vector<2x128xf32>
    %c127_i32_7 = arith.constant 127 : i32
    %26 = tpu.dynamic_rotate %25 by %c127_i32_7 dim 1 : vector<2x128xf32>, i32 -> vector<2x128xf32>
    %c1_i32_8 = arith.constant 1 : i32
    %27 = tpu.dynamic_rotate %25 by %c1_i32_8 dim 1 : vector<2x128xf32>, i32 -> vector<2x128xf32>
    %c1_i32_9 = arith.constant 1 : i32
    %28 = vector.broadcast %c1_i32_9 : i32 to vector<2x128xi32>
    %29 = arith.andi %7, %28 : vector<2x128xi32>
    %c0_i32_10 = arith.constant 0 : i32
    %30 = vector.broadcast %c0_i32_10 : i32 to vector<2x128xi32>
    %31 = arith.cmpi eq, %29, %30 : vector<2x128xi32>
    %32 = arith.select %31, %26, %27 : vector<2x128xi1>, vector<2x128xf32>
    %33 = arith.addf %25, %32 : vector<2x128xf32>
    %c126_i32_11 = arith.constant 126 : i32
    %34 = tpu.dynamic_rotate %33 by %c126_i32_11 dim 1 : vector<2x128xf32>, i32 -> vector<2x128xf32>
    %c2_i32_12 = arith.constant 2 : i32
    %35 = tpu.dynamic_rotate %33 by %c2_i32_12 dim 1 : vector<2x128xf32>, i32 -> vector<2x128xf32>
    %c3_i32_13 = arith.constant 3 : i32
    %36 = vector.broadcast %c3_i32_13 : i32 to vector<2x128xi32>
    %37 = arith.andi %7, %36 : vector<2x128xi32>
    %c2_i32_14 = arith.constant 2 : i32
    %38 = vector.broadcast %c2_i32_14 : i32 to vector<2x128xi32>
    %39 = arith.cmpi slt, %37, %38 : vector<2x128xi32>
    %40 = arith.select %39, %34, %35 : vector<2x128xi1>, vector<2x128xf32>
    %41 = arith.addf %33, %40 : vector<2x128xf32>
    %42 = math.log %41 : vector<2x128xf32>
    %43 = arith.subf %24, %42 : vector<2x128xf32>
    %c0_15 = arith.constant 0 : index
    %c0_16 = arith.constant 0 : index
    %44 = vector.load %arg3[%c0_15, %c0_16] : memref<2x128xf32, #tpu.memory_space<vmem>>, vector<2x128xf32>
    tpu.vector_store %arg3[%c0_15, %c0_16], %43 {strides = array<i32>} : memref<2x128xf32, #tpu.memory_space<vmem>>, vector<2x128xf32>,
    return
  }
}

</mosaic_0001>

<llo_original>
// kernel: bert_multilabel_cls_head.1
$region0: #{bert_multilabel_cls_head.1}
  #allocation0 [shape = 'u32[]', space=smem, size = 0x4, offset = 0x4, fixed_abs, tag = 'smem constant byte address 0x4 - core index']
  #allocation1 [shape = 'u32[144,128]{1,0:T(1,128)}', space=vmem, size = 0x12000, scoped, tag = 'internal scratch']
  %s0 = inlined_call_operand.hbm [shape: f32[2,1024], index: 0, kind: input, shape index: {}]
  %s1 = inlined_call_operand.hbm [shape: bf16[1024,128], index: 1, kind: input, shape index: {}]
  %s2 = inlined_call_operand.vmem [shape: f32[1,128], index: 2, kind: input, shape index: {}]
  %s3 = inlined_call_operand.vmem [shape: f32[2,128], index: 3, kind: output, shape index: {}]
  %s4 = sld [smem:[#allocation0]]
  $region30: #{bert_multilabel_cls_head.1} parent=0
    _
  %s6 = ssub.s32 1, %s4
  %s7 = scalar_select 0, %s6, %s4
  $region1: #{bert_multilabel_cls_head.1} parent=0
    #allocation2 [shape = 'u8[8192]{0}', space=vmem, size = 0x2000, scoped, tag = 'input window, operand 0, single buffered']
    #allocation3 [shape = 's32[1]{0}', space=sflag, size = 0x4, scoped, tag = 'scoped memory for bert_multilabel_cls_head.1']
    #allocation4 [shape = 'u8[262144]{0}', space=vmem, size = 0x40000, scoped, tag = 'input window, operand 1, single buffered']
    #allocation5 [shape = 's32[1]{0}', space=sflag, size = 0x4, scoped, tag = 'scoped memory for bert_multilabel_cls_head.1']
    %8 = vsyncpa [#allocation3], 0
    %9 = vsyncpa [#allocation5], 0
    // Predicated region
    $region2: #{bert_multilabel_cls_head.1} parent=1 // pred_check
      _
    $region3: #{bert_multilabel_cls_head.1} parent=1 // pred_check_branch
      %11 = sbr.rel (0) target = $region5
    $region4: #{bert_multilabel_cls_head.1} parent=1 // pred_region
      %s13 = ssub.s32 256, 256
      %14 = vsyncadd [#allocation3], %s13
      %s16 = sshll.u32 [#allocation2], 4
      %s17 = int_to_ptr.vmem [resolvable:$true] %s16
      %19 = dma.hbm_to_vmem [thread:$0]  %s0, 256, %s17, [#allocation3]
    $region5: #{bert_multilabel_cls_head.1} parent=1 // pred_fallthru
      _
    // Predicated region
    $region6: #{bert_multilabel_cls_head.1} parent=1 // pred_check
      _
    $region7: #{bert_multilabel_cls_head.1} parent=1 // pred_check_branch
      %21 = sbr.rel (0) target = $region9
    $region8: #{bert_multilabel_cls_head.1} parent=1 // pred_region
      %s23 = ssub.s32 8192, 8192
      %24 = vsyncadd [#allocation5], %s23
      %s25 = sshll.u32 [#allocation4], 4
      %s26 = int_to_ptr.vmem [resolvable:$true] %s25
      %31 = dma.hbm_to_vmem [thread:$0]  %s1, 8192, %s26, [#allocation5], 64, 64, 4
    $region9: #{bert_multilabel_cls_head.1} parent=1 // pred_fallthru
      _
    // Predicated region
    $region10: #{bert_multilabel_cls_head.1} parent=1 // pred_check
      _
    $region11: #{bert_multilabel_cls_head.1} parent=1 // pred_check_branch
      %33 = sbr.rel (0) target = $region13
    $region12: #{bert_multilabel_cls_head.1} parent=1 // pred_region
      _
    $region13: #{bert_multilabel_cls_head.1} parent=1 // pred_fallthru
      _
    // Predicated region
    $region14: #{bert_multilabel_cls_head.1} parent=1 // pred_check
      _
    $region15: #{bert_multilabel_cls_head.1} parent=1 // pred_check_branch
      %35 = sbr.rel (0) target = $region17
    $region16: #{bert_multilabel_cls_head.1} parent=1 // pred_region
      %36 = dma.done [#allocation3], 256
    $region17: #{bert_multilabel_cls_head.1} parent=1 // pred_fallthru
      _
    // Predicated region
    $region18: #{bert_multilabel_cls_head.1} parent=1 // pred_check
      _
    $region19: #{bert_multilabel_cls_head.1} parent=1 // pred_check_branch
      %38 = sbr.rel (0) target = $region21
    $region20: #{bert_multilabel_cls_head.1} parent=1 // pred_region
      %39 = dma.done [#allocation5], 8192
    $region21: #{bert_multilabel_cls_head.1} parent=1 // pred_fallthru
      _
    %v41 = vld [vmem:[#allocation2] sm:$0xff]
    %v42 = vld [vmem:[#allocation2 + $0x8] sm:$0xff]
    %v45 = vcombine.high %v41, %v41
    %v47 = vunpack.c.l.s4 1983009808
    %v48 = vunpack.c.0.s8 %v47
    %v49 = vlaneseq
    %v50 = vshrl.u32 %v49, 7
    %v51 = vsub.s32 %v48, %v50
    %v52 = vrot.slane %v41, %v51
    %v54 = vunpack.c.l.s4 1983009808
    %v55 = vunpack.c.0.s8 %v54
    %v56 = vlaneseq
    %v57 = vshrl.u32 %v56, 7
    %v58 = vsub.s32 %v55, %v57
    %v59 = vrot.slane %v45, %v58
    %v60 = vcombine.high %v52, %v52
    %v61 = vcombine.high %v59, %v59
    %v62 = vcombine.high %v42, %v42
    %v64 = vunpack.c.l.s4 1983009808
    %v65 = vunpack.c.0.s8 %v64
    %v66 = vlaneseq
    %v67 = vshrl.u32 %v66, 7
    %v68 = vsub.s32 %v65, %v67
    %v69 = vrot.slane %v42, %v68
    %v71 = vunpack.c.l.s4 1983009808
    %v72 = vunpack.c.0.s8 %v71
    %v73 = vlaneseq
    %v74 = vshrl.u32 %v73, 7
    %v75 = vsub.s32 %v72, %v74
    %v76 = vrot.slane %v62, %v75
    %v77 = vcombine.high %v69, %v69
    %v78 = vcombine.high %v76, %v76
    %v87 = vpack.c.bf16 %v52, %v52
    %v88 = vpack.c.bf16 %v60, %v60
    %v89 = vpack.c.bf16 %v59, %v59
    %v90 = vpack.c.bf16 %v61, %v61
    %v91 = vpack.c.bf16 %v69, %v69
    %v92 = vpack.c.bf16 %v77, %v77
    %v93 = vpack.c.bf16 %v76, %v76
    %v94 = vpack.c.bf16 %v78, %v78
    %v95 = vld [vmem:[#allocation4] sm:$0xf]
    %v96 = vld [vmem:[#allocation4 + $0x4] sm:$0xf]
    %v97 = vld [vmem:[#allocation4 + $0x8] sm:$0xf]
    %v98 = vld [vmem:[#allocation4 + $0xc] sm:$0xf]
    %v99 = vld [vmem:[#allocation4 + $0x10] sm:$0xf]
    %v100 = vld [vmem:[#allocation4 + $0x14] sm:$0xf]
    %v101 = vld [vmem:[#allocation4 + $0x18] sm:$0xf]
    %v102 = vld [vmem:[#allocation4 + $0x1c] sm:$0xf]
    %v103 = vld [vmem:[#allocation4 + $0x20] sm:$0xf]
    %v104 = vld [vmem:[#allocation4 + $0x24] sm:$0xf]
    %v105 = vld [vmem:[#allocation4 + $0x28] sm:$0xf]
    %v106 = vld [vmem:[#allocation4 + $0x2c] sm:$0xf]
    %v107 = vld [vmem:[#allocation4 + $0x30] sm:$0xf]
    %v108 = vld [vmem:[#allocation4 + $0x34] sm:$0xf]
    %v109 = vld [vmem:[#allocation4 + $0x38] sm:$0xf]
    %v110 = vld [vmem:[#allocation4 + $0x3c] sm:$0xf]
    %v111 = vld [vmem:[#allocation4 + $0x40] sm:$0xf]
    %v112 = vld [vmem:[#allocation4 + $0x44] sm:$0xf]
    %v113 = vld [vmem:[#allocation4 + $0x48] sm:$0xf]
    %v114 = vld [vmem:[#allocation4 + $0x4c] sm:$0xf]
    %v115 = vld [vmem:[#allocation4 + $0x50] sm:$0xf]
    %v116 = vld [vmem:[#allocation4 + $0x54] sm:$0xf]
    %v117 = vld [vmem:[#allocation4 + $0x58] sm:$0xf]
    %v118 = vld [vmem:[#allocation4 + $0x5c] sm:$0xf]
    %v119 = vld [vmem:[#allocation4 + $0x60] sm:$0xf]
    %v120 = vld [vmem:[#allocation4 + $0x64] sm:$0xf]
    %v121 = vld [vmem:[#allocation4 + $0x68] sm:$0xf]
    %v122 = vld [vmem:[#allocation4 + $0x6c] sm:$0xf]
    %v123 = vld [vmem:[#allocation4 + $0x70] sm:$0xf]
    %v124 = vld [vmem:[#allocation4 + $0x74] sm:$0xf]
    %v125 = vld [vmem:[#allocation4 + $0x78] sm:$0xf]
    %v126 = vld [vmem:[#allocation4 + $0x7c] sm:$0xf]
    %v127 = vld [vmem:[#allocation4 + $0x80] sm:$0xf]
    %v128 = vld [vmem:[#allocation4 + $0x84] sm:$0xf]
    %v129 = vld [vmem:[#allocation4 + $0x88] sm:$0xf]
    %v130 = vld [vmem:[#allocation4 + $0x8c] sm:$0xf]
    %v131 = vld [vmem:[#allocation4 + $0x90] sm:$0xf]
    %v132 = vld [vmem:[#allocation4 + $0x94] sm:$0xf]
    %v133 = vld [vmem:[#allocation4 + $0x98] sm:$0xf]
    %v134 = vld [vmem:[#allocation4 + $0x9c] sm:$0xf]
    %v135 = vld [vmem:[#allocation4 + $0xa0] sm:$0xf]
    %v136 = vld [vmem:[#allocation4 + $0xa4] sm:$0xf]
    %v137 = vld [vmem:[#allocation4 + $0xa8] sm:$0xf]
    %v138 = vld [vmem:[#allocation4 + $0xac] sm:$0xf]
    %v139 = vld [vmem:[#allocation4 + $0xb0] sm:$0xf]
    %v140 = vld [vmem:[#allocation4 + $0xb4] sm:$0xf]
    %v141 = vld [vmem:[#allocation4 + $0xb8] sm:$0xf]
    %v142 = vld [vmem:[#allocation4 + $0xbc] sm:$0xf]
    %v143 = vld [vmem:[#allocation4 + $0xc0] sm:$0xf]
    %v144 = vld [vmem:[#allocation4 + $0xc4] sm:$0xf]
    %v145 = vld [vmem:[#allocation4 + $0xc8] sm:$0xf]
    %v146 = vld [vmem:[#allocation4 + $0xcc] sm:$0xf]
    %v147 = vld [vmem:[#allocation4 + $0xd0] sm:$0xf]
    %v148 = vld [vmem:[#allocation4 + $0xd4] sm:$0xf]
    %v149 = vld [vmem:[#allocation4 + $0xd8] sm:$0xf]
    %v150 = vld [vmem:[#allocation4 + $0xdc] sm:$0xf]
    %v151 = vld [vmem:[#allocation4 + $0xe0] sm:$0xf]
    %v152 = vld [vmem:[#allocation4 + $0xe4] sm:$0xf]
    %v153 = vld [vmem:[#allocation4 + $0xe8] sm:$0xf]
    %v154 = vld [vmem:[#allocation4 + $0xec] sm:$0xf]
    %v155 = vld [vmem:[#allocation4 + $0xf0] sm:$0xf]
    %v156 = vld [vmem:[#allocation4 + $0xf4] sm:$0xf]
    %v157 = vld [vmem:[#allocation4 + $0xf8] sm:$0xf]
    %v158 = vld [vmem:[#allocation4 + $0xfc] sm:$0xf]
    %v159 = vld [vmem:[#allocation4 + $0x100] sm:$0xf]
    %v160 = vld [vmem:[#allocation4 + $0x104] sm:$0xf]
    %v161 = vld [vmem:[#allocation4 + $0x108] sm:$0xf]
    %v162 = vld [vmem:[#allocation4 + $0x10c] sm:$0xf]
    %v163 = vld [vmem:[#allocation4 + $0x110] sm:$0xf]
    %v164 = vld [vmem:[#allocation4 + $0x114] sm:$0xf]
    %v165 = vld [vmem:[#allocation4 + $0x118] sm:$0xf]
    %v166 = vld [vmem:[#allocation4 + $0x11c] sm:$0xf]
    %v167 = vld [vmem:[#allocation4 + $0x120] sm:$0xf]
    %v168 = vld [vmem:[#allocation4 + $0x124] sm:$0xf]
    %v169 = vld [vmem:[#allocation4 + $0x128] sm:$0xf]
    %v170 = vld [vmem:[#allocation4 + $0x12c] sm:$0xf]
    %v171 = vld [vmem:[#allocation4 + $0x130] sm:$0xf]
    %v172 = vld [vmem:[#allocation4 + $0x134] sm:$0xf]
    %v173 = vld [vmem:[#allocation4 + $0x138] sm:$0xf]
    %v174 = vld [vmem:[#allocation4 + $0x13c] sm:$0xf]
    %v175 = vld [vmem:[#allocation4 + $0x140] sm:$0xf]
    %v176 = vld [vmem:[#allocation4 + $0x144] sm:$0xf]
    %v177 = vld [vmem:[#allocation4 + $0x148] sm:$0xf]
    %v178 = vld [vmem:[#allocation4 + $0x14c] sm:$0xf]
    %v179 = vld [vmem:[#allocation4 + $0x150] sm:$0xf]
    %v180 = vld [vmem:[#allocation4 + $0x154] sm:$0xf]
    %v181 = vld [vmem:[#allocation4 + $0x158] sm:$0xf]
    %v182 = vld [vmem:[#allocation4 + $0x15c] sm:$0xf]
    %v183 = vld [vmem:[#allocation4 + $0x160] sm:$0xf]
    %v184 = vld [vmem:[#allocation4 + $0x164] sm:$0xf]
    %v185 = vld [vmem:[#allocation4 + $0x168] sm:$0xf]
    %v186 = vld [vmem:[#allocation4 + $0x16c] sm:$0xf]
    %v187 = vld [vmem:[#allocation4 + $0x170] sm:$0xf]
    %v188 = vld [vmem:[#allocation4 + $0x174] sm:$0xf]
    %v189 = vld [vmem:[#allocation4 + $0x178] sm:$0xf]
    %v190 = vld [vmem:[#allocation4 + $0x17c] sm:$0xf]
    %v191 = vld [vmem:[#allocation4 + $0x180] sm:$0xf]
    %v192 = vld [vmem:[#allocation4 + $0x184] sm:$0xf]
    %v193 = vld [vmem:[#allocation4 + $0x188] sm:$0xf]
    %v194 = vld [vmem:[#allocation4 + $0x18c] sm:$0xf]
    %v195 = vld [vmem:[#allocation4 + $0x190] sm:$0xf]
    %v196 = vld [vmem:[#allocation4 + $0x194] sm:$0xf]
    %v197 = vld [vmem:[#allocation4 + $0x198] sm:$0xf]
    %v198 = vld [vmem:[#allocation4 + $0x19c] sm:$0xf]
    %v199 = vld [vmem:[#allocation4 + $0x1a0] sm:$0xf]
    %v200 = vld [vmem:[#allocation4 + $0x1a4] sm:$0xf]
    %v201 = vld [vmem:[#allocation4 + $0x1a8] sm:$0xf]
    %v202 = vld [vmem:[#allocation4 + $0x1ac] sm:$0xf]
    %v203 = vld [vmem:[#allocation4 + $0x1b0] sm:$0xf]
    %v204 = vld [vmem:[#allocation4 + $0x1b4] sm:$0xf]
    %v205 = vld [vmem:[#allocation4 + $0x1b8] sm:$0xf]
    %v206 = vld [vmem:[#allocation4 + $0x1bc] sm:$0xf]
    %v207 = vld [vmem:[#allocation4 + $0x1c0] sm:$0xf]
    %v208 = vld [vmem:[#allocation4 + $0x1c4] sm:$0xf]
    %v209 = vld [vmem:[#allocation4 + $0x1c8] sm:$0xf]
    %v210 = vld [vmem:[#allocation4 + $0x1cc] sm:$0xf]
    %v211 = vld [vmem:[#allocation4 + $0x1d0] sm:$0xf]
    %v212 = vld [vmem:[#allocation4 + $0x1d4] sm:$0xf]
    %v213 = vld [vmem:[#allocation4 + $0x1d8] sm:$0xf]
    %v214 = vld [vmem:[#allocation4 + $0x1dc] sm:$0xf]
    %v215 = vld [vmem:[#allocation4 + $0x1e0] sm:$0xf]
    %v216 = vld [vmem:[#allocation4 + $0x1e4] sm:$0xf]
    %v217 = vld [vmem:[#allocation4 + $0x1e8] sm:$0xf]
    %v218 = vld [vmem:[#allocation4 + $0x1ec] sm:$0xf]
    %v219 = vld [vmem:[#allocation4 + $0x1f0] sm:$0xf]
    %v220 = vld [vmem:[#allocation4 + $0x1f4] sm:$0xf]
    %v221 = vld [vmem:[#allocation4 + $0x1f8] sm:$0xf]
    %v222 = vld [vmem:[#allocation4 + $0x1fc] sm:$0xf]
    %v223 = vld [vmem:[%s2] sm:$0x1]
    %v225 = vlaneseq
    %v226 = vshrl.u32 %v225, 7
    %v227 = vsub.s32 0, %v226
    %v228 = vrot.slane %v223, %v227
    %v358 = vunpack.c.l.b16 %v95
    %v359 = vunpack.c.l.b16 %v96
    %v360 = vunpack.c.l.b16 %v97
    %v361 = vunpack.c.l.b16 %v98
    %v362 = vunpack.c.l.b16 %v99
    %v363 = vunpack.c.l.b16 %v100
    %v364 = vunpack.c.l.b16 %v101
    %v365 = vunpack.c.l.b16 %v102
    %v366 = vunpack.c.l.b16 %v103
    %v367 = vunpack.c.l.b16 %v104
    %v368 = vunpack.c.l.b16 %v105
    %v369 = vunpack.c.l.b16 %v106
    %v370 = vunpack.c.l.b16 %v107
    %v371 = vunpack.c.l.b16 %v108
    %v372 = vunpack.c.l.b16 %v109
    %v373 = vunpack.c.l.b16 %v110
    %v374 = vunpack.c.l.b16 %v111
    %v375 = vunpack.c.l.b16 %v112
    %v376 = vunpack.c.l.b16 %v113
    %v377 = vunpack.c.l.b16 %v114
    %v378 = vunpack.c.l.b16 %v115
    %v379 = vunpack.c.l.b16 %v116
    %v380 = vunpack.c.l.b16 %v117
    %v381 = vunpack.c.l.b16 %v118
    %v382 = vunpack.c.l.b16 %v119
    %v383 = vunpack.c.l.b16 %v120
    %v384 = vunpack.c.l.b16 %v121
    %v385 = vunpack.c.l.b16 %v122
    %v386 = vunpack.c.l.b16 %v123
    %v387 = vunpack.c.l.b16 %v124
    %v388 = vunpack.c.l.b16 %v125
    %v389 = vunpack.c.l.b16 %v126
    %v390 = vunpack.c.l.b16 %v127
    %v391 = vunpack.c.l.b16 %v128
    %v392 = vunpack.c.l.b16 %v129
    %v393 = vunpack.c.l.b16 %v130
    %v394 = vunpack.c.l.b16 %v131
    %v395 = vunpack.c.l.b16 %v132
    %v396 = vunpack.c.l.b16 %v133
    %v397 = vunpack.c.l.b16 %v134
    %v398 = vunpack.c.l.b16 %v135
    %v399 = vunpack.c.l.b16 %v136
    %v400 = vunpack.c.l.b16 %v137
    %v401 = vunpack.c.l.b16 %v138
    %v402 = vunpack.c.l.b16 %v139
    %v403 = vunpack.c.l.b16 %v140
    %v404 = vunpack.c.l.b16 %v141
    %v405 = vunpack.c.l.b16 %v142
    %v406 = vunpack.c.l.b16 %v143
    %v407 = vunpack.c.l.b16 %v144
    %v408 = vunpack.c.l.b16 %v145
    %v409 = vunpack.c.l.b16 %v146
    %v410 = vunpack.c.l.b16 %v147
    %v411 = vunpack.c.l.b16 %v148
    %v412 = vunpack.c.l.b16 %v149
    %v413 = vunpack.c.l.b16 %v150
    %v414 = vunpack.c.l.b16 %v151
    %v415 = vunpack.c.l.b16 %v152
    %v416 = vunpack.c.l.b16 %v153
    %v417 = vunpack.c.l.b16 %v154
    %v418 = vunpack.c.l.b16 %v155
    %v419 = vunpack.c.l.b16 %v156
    %v420 = vunpack.c.l.b16 %v157
    %v421 = vunpack.c.l.b16 %v158
    %v422 = vunpack.c.l.b16 %v159
    %v423 = vunpack.c.l.b16 %v160
    %v424 = vunpack.c.l.b16 %v161
    %v425 = vunpack.c.l.b16 %v162
    %v426 = vunpack.c.l.b16 %v163
    %v427 = vunpack.c.l.b16 %v164
    %v428 = vunpack.c.l.b16 %v165
    %v429 = vunpack.c.l.b16 %v166
    %v430 = vunpack.c.l.b16 %v167
    %v431 = vunpack.c.l.b16 %v168
    %v432 = vunpack.c.l.b16 %v169
    %v433 = vunpack.c.l.b16 %v170
    %v434 = vunpack.c.l.b16 %v171
    %v435 = vunpack.c.l.b16 %v172
    %v436 = vunpack.c.l.b16 %v173
    %v437 = vunpack.c.l.b16 %v174
    %v438 = vunpack.c.l.b16 %v175
    %v439 = vunpack.c.l.b16 %v176
    %v440 = vunpack.c.l.b16 %v177
    %v441 = vunpack.c.l.b16 %v178
    %v442 = vunpack.c.l.b16 %v179
    %v443 = vunpack.c.l.b16 %v180
    %v444 = vunpack.c.l.b16 %v181
    %v445 = vunpack.c.l.b16 %v182
    %v446 = vunpack.c.l.b16 %v183
    %v447 = vunpack.c.l.b16 %v184
    %v448 = vunpack.c.l.b16 %v185
    %v449 = vunpack.c.l.b16 %v186
    %v450 = vunpack.c.l.b16 %v187
    %v451 = vunpack.c.l.b16 %v188
    %v452 = vunpack.c.l.b16 %v189
    %v453 = vunpack.c.l.b16 %v190
    %v454 = vunpack.c.l.b16 %v191
    %v455 = vunpack.c.l.b16 %v192
    %v456 = vunpack.c.l.b16 %v193
    %v457 = vunpack.c.l.b16 %v194
    %v458 = vunpack.c.l.b16 %v195
    %v459 = vunpack.c.l.b16 %v196
    %v460 = vunpack.c.l.b16 %v197
    %v461 = vunpack.c.l.b16 %v198
    %v462 = vunpack.c.l.b16 %v199
    %v463 = vunpack.c.l.b16 %v200
    %v464 = vunpack.c.l.b16 %v201
    %v465 = vunpack.c.l.b16 %v202
    %v466 = vunpack.c.l.b16 %v203
    %v467 = vunpack.c.l.b16 %v204
    %v468 = vunpack.c.l.b16 %v205
    %v469 = vunpack.c.l.b16 %v206
    %v470 = vunpack.c.l.b16 %v207
    %v471 = vunpack.c.l.b16 %v208
    %v472 = vunpack.c.l.b16 %v209
    %v473 = vunpack.c.l.b16 %v210
    %v474 = vunpack.c.l.b16 %v211
    %v475 = vunpack.c.l.b16 %v212
    %v476 = vunpack.c.l.b16 %v213
    %v477 = vunpack.c.l.b16 %v214
    %v478 = vunpack.c.l.b16 %v215
    %v479 = vunpack.c.l.b16 %v216
    %v480 = vunpack.c.l.b16 %v217
    %v481 = vunpack.c.l.b16 %v218
    %v482 = vunpack.c.l.b16 %v219
    %v483 = vunpack.c.l.b16 %v220
    %v484 = vunpack.c.l.b16 %v221
    %v485 = vunpack.c.l.b16 %v222
    %v486 = vpack.c.b16 %v359, %v358
    %v487 = vpack.c.b16 %v361, %v360
    %v488 = vpack.c.b16 %v363, %v362
    %v489 = vpack.c.b16 %v365, %v364
    %v490 = vpack.c.b16 %v367, %v366
    %v491 = vpack.c.b16 %v369, %v368
    %v492 = vpack.c.b16 %v371, %v370
    %v493 = vpack.c.b16 %v373, %v372
    %v494 = vpack.c.b16 %v375, %v374
    %v495 = vpack.c.b16 %v377, %v376
    %v496 = vpack.c.b16 %v379, %v378
    %v497 = vpack.c.b16 %v381, %v380
    %v498 = vpack.c.b16 %v383, %v382
    %v499 = vpack.c.b16 %v385, %v384
    %v500 = vpack.c.b16 %v387, %v386
    %v501 = vpack.c.b16 %v389, %v388
    %v502 = vpack.c.b16 %v391, %v390
    %v503 = vpack.c.b16 %v393, %v392
    %v504 = vpack.c.b16 %v395, %v394
    %v505 = vpack.c.b16 %v397, %v396
    %v506 = vpack.c.b16 %v399, %v398
    %v507 = vpack.c.b16 %v401, %v400
    %v508 = vpack.c.b16 %v403, %v402
    %v509 = vpack.c.b16 %v405, %v404
    %v510 = vpack.c.b16 %v407, %v406
    %v511 = vpack.c.b16 %v409, %v408
    %v512 = vpack.c.b16 %v411, %v410
    %v513 = vpack.c.b16 %v413, %v412
    %v514 = vpack.c.b16 %v415, %v414
    %v515 = vpack.c.b16 %v417, %v416
    %v516 = vpack.c.b16 %v419, %v418
    %v517 = vpack.c.b16 %v421, %v420
    %v518 = vpack.c.b16 %v423, %v422
    %v519 = vpack.c.b16 %v425, %v424
    %v520 = vpack.c.b16 %v427, %v426
    %v521 = vpack.c.b16 %v429, %v428
    %v522 = vpack.c.b16 %v431, %v430
    %v523 = vpack.c.b16 %v433, %v432
    %v524 = vpack.c.b16 %v435, %v434
    %v525 = vpack.c.b16 %v437, %v436
    %v526 = vpack.c.b16 %v439, %v438
    %v527 = vpack.c.b16 %v441, %v440
    %v528 = vpack.c.b16 %v443, %v442
    %v529 = vpack.c.b16 %v445, %v444
    %v530 = vpack.c.b16 %v447, %v446
    %v531 = vpack.c.b16 %v449, %v448
    %v532 = vpack.c.b16 %v451, %v450
    %v533 = vpack.c.b16 %v453, %v452
    %v534 = vpack.c.b16 %v455, %v454
    %v535 = vpack.c.b16 %v457, %v456
    %v536 = vpack.c.b16 %v459, %v458
    %v537 = vpack.c.b16 %v461, %v460
    %v538 = vpack.c.b16 %v463, %v462
    %v539 = vpack.c.b16 %v465, %v464
    %v540 = vpack.c.b16 %v467, %v466
    %v541 = vpack.c.b16 %v469, %v468
    %v542 = vpack.c.b16 %v471, %v470
    %v543 = vpack.c.b16 %v473, %v472
    %v544 = vpack.c.b16 %v475, %v474
    %v545 = vpack.c.b16 %v477, %v476
    %v546 = vpack.c.b16 %v479, %v478
    %v547 = vpack.c.b16 %v481, %v480
    %v548 = vpack.c.b16 %v483, %v482
    %v549 = vpack.c.b16 %v485, %v484
    %614 = vmatprep.subr.bf16.mxu0 0
    %615 = vmatpush1.bf16.msra.mxu0 %v486
    %616 = vmatprep.subr.bf16.mxu0 0
    %617 = vmatpush1.bf16.msra.mxu0 %v487
    %618 = vmatprep.subr.bf16.mxu0 0
    %619 = vmatpush1.bf16.msra.mxu0 %v488
    %620 = vmatprep.subr.bf16.mxu0 0
    %621 = vmatpush1.bf16.msra.mxu0 %v489
    %622 = vmatprep.subr.bf16.mxu0 0
    %623 = vmatpush1.bf16.msra.mxu0 %v490
    %624 = vmatprep.subr.bf16.mxu0 0
    %625 = vmatpush1.bf16.msra.mxu0 %v491
    %626 = vmatprep.subr.bf16.mxu0 0
    %627 = vmatpush1.bf16.msra.mxu0 %v492
    %628 = vmatprep.subr.bf16.mxu0 0
    %629 = vmatpush1.bf16.msra.mxu0 %v493
    %630 = vmatprep.subr.bf16.mxu0 0
    %631 = vmatpush1.bf16.msra.mxu0 %v494
    %632 = vmatprep.subr.bf16.mxu0 0
    %633 = vmatpush1.bf16.msra.mxu0 %v495
    %634 = vmatprep.subr.bf16.mxu0 0
    %635 = vmatpush1.bf16.msra.mxu0 %v496
    %636 = vmatprep.subr.bf16.mxu0 0
    %637 = vmatpush1.bf16.msra.mxu0 %v497
    %638 = vmatprep.subr.bf16.mxu0 0
    %639 = vmatpush1.bf16.msra.mxu0 %v498
    %640 = vmatprep.subr.bf16.mxu0 0
    %641 = vmatpush1.bf16.msra.mxu0 %v499
    %642 = vmatprep.subr.bf16.mxu0 0
    %643 = vmatpush1.bf16.msra.mxu0 %v500
    %644 = vmatprep.subr.bf16.mxu0 0
    %645 = vmatpush1.bf16.msra.mxu0 %v501
    %646 = vmatprep.mubr.bf16.mxu0 %v88
    %647 = vmatmul.mubr.bf16.gmra.mrb[0].mxu0 %v87
    %v648 = vpop.f32.mrb[0].mxu0
    %v649 = vadd.f32 %v228, %v648
    %v650 = vpop.f32.mrb[0].mxu0
    %v651 = vpop.f32.mrb[0].mxu0
    %v652 = vpop.f32.mrb[0].mxu0
    %653 = vdwg.mxu0
    %654 = vmatprep.subr.bf16.mxu0 0
    %655 = vmatpush1.bf16.msra.mxu0 %v502
    %656 = vmatprep.subr.bf16.mxu0 0
    %657 = vmatpush1.bf16.msra.mxu0 %v503
    %658 = vmatprep.subr.bf16.mxu0 0
    %659 = vmatpush1.bf16.msra.mxu0 %v504
    %660 = vmatprep.subr.bf16.mxu0 0
    %661 = vmatpush1.bf16.msra.mxu0 %v505
    %662 = vmatprep.subr.bf16.mxu0 0
    %663 = vmatpush1.bf16.msra.mxu0 %v506
    %664 = vmatprep.subr.bf16.mxu0 0
    %665 = vmatpush1.bf16.msra.mxu0 %v507
    %666 = vmatprep.subr.bf16.mxu0 0
    %667 = vmatpush1.bf16.msra.mxu0 %v508
    %668 = vmatprep.subr.bf16.mxu0 0
    %669 = vmatpush1.bf16.msra.mxu0 %v509
    %670 = vmatprep.subr.bf16.mxu0 0
    %671 = vmatpush1.bf16.msra.mxu0 %v510
    %672 = vmatprep.subr.bf16.mxu0 0
    %673 = vmatpush1.bf16.msra.mxu0 %v511
    %674 = vmatprep.subr.bf16.mxu0 0
    %675 = vmatpush1.bf16.msra.mxu0 %v512
    %676 = vmatprep.subr.bf16.mxu0 0
    %677 = vmatpush1.bf16.msra.mxu0 %v513
    %678 = vmatprep.subr.bf16.mxu0 0
    %679 = vmatpush1.bf16.msra.mxu0 %v514
    %680 = vmatprep.subr.bf16.mxu0 0
    %681 = vmatpush1.bf16.msra.mxu0 %v515
    %682 = vmatprep.subr.bf16.mxu0 0
    %683 = vmatpush1.bf16.msra.mxu0 %v516
    %684 = vmatprep.subr.bf16.mxu0 0
    %685 = vmatpush1.bf16.msra.mxu0 %v517
    %686 = vmatprep.mubr.bf16.mxu0 %v90
    %687 = vmatmul.mubr.bf16.gmra.mrb[0].mxu0 %v89
    %v688 = vpop.f32.mrb[0].mxu0
    %v689 = vadd.f32 %v649, %v688
    %v690 = vpop.f32.mrb[0].mxu0
    %v691 = vpop.f32.mrb[0].mxu0
    %v692 = vpop.f32.mrb[0].mxu0
    %693 = vdwg.mxu0
    %694 = vmatprep.subr.bf16.mxu0 0
    %695 = vmatpush1.bf16.msra.mxu0 %v518
    %696 = vmatprep.subr.bf16.mxu0 0
    %697 = vmatpush1.bf16.msra.mxu0 %v519
    %698 = vmatprep.subr.bf16.mxu0 0
    %699 = vmatpush1.bf16.msra.mxu0 %v520
    %700 = vmatprep.subr.bf16.mxu0 0
    %701 = vmatpush1.bf16.msra.mxu0 %v521
    %702 = vmatprep.subr.bf16.mxu0 0
    %703 = vmatpush1.bf16.msra.mxu0 %v522
    %704 = vmatprep.subr.bf16.mxu0 0
    %705 = vmatpush1.bf16.msra.mxu0 %v523
    %706 = vmatprep.subr.bf16.mxu0 0
    %707 = vmatpush1.bf16.msra.mxu0 %v524
    %708 = vmatprep.subr.bf16.mxu0 0
    %709 = vmatpush1.bf16.msra.mxu0 %v525
    %710 = vmatprep.subr.bf16.mxu0 0
    %711 = vmatpush1.bf16.msra.mxu0 %v526
    %712 = vmatprep.subr.bf16.mxu0 0
    %713 = vmatpush1.bf16.msra.mxu0 %v527
    %714 = vmatprep.subr.bf16.mxu0 0
    %715 = vmatpush1.bf16.msra.mxu0 %v528
    %716 = vmatprep.subr.bf16.mxu0 0
    %717 = vmatpush1.bf16.msra.mxu0 %v529
    %718 = vmatprep.subr.bf16.mxu0 0
    %719 = vmatpush1.bf16.msra.mxu0 %v530
    %720 = vmatprep.subr.bf16.mxu0 0
    %721 = vmatpush1.bf16.msra.mxu0 %v531
    %722 = vmatprep.subr.bf16.mxu0 0
    %723 = vmatpush1.bf16.msra.mxu0 %v532
    %724 = vmatprep.subr.bf16.mxu0 0
    %725 = vmatpush1.bf16.msra.mxu0 %v533
    %726 = vmatprep.mubr.bf16.mxu0 %v92
    %727 = vmatmul.mubr.bf16.gmra.mrb[0].mxu0 %v91
    %v728 = vpop.f32.mrb[0].mxu0
    %v729 = vadd.f32 %v689, %v728
    %v730 = vpop.f32.mrb[0].mxu0
    %v731 = vpop.f32.mrb[0].mxu0
    %v732 = vpop.f32.mrb[0].mxu0
    %733 = vdwg.mxu0
    %734 = vmatprep.subr.bf16.mxu0 0
    %735 = vmatpush1.bf16.msra.mxu0 %v534
    %736 = vmatprep.subr.bf16.mxu0 0
    %737 = vmatpush1.bf16.msra.mxu0 %v535
    %738 = vmatprep.subr.bf16.mxu0 0
    %739 = vmatpush1.bf16.msra.mxu0 %v536
    %740 = vmatprep.subr.bf16.mxu0 0
    %741 = vmatpush1.bf16.msra.mxu0 %v537
    %742 = vmatprep.subr.bf16.mxu0 0
    %743 = vmatpush1.bf16.msra.mxu0 %v538
    %744 = vmatprep.subr.bf16.mxu0 0
    %745 = vmatpush1.bf16.msra.mxu0 %v539
    %746 = vmatprep.subr.bf16.mxu0 0
    %747 = vmatpush1.bf16.msra.mxu0 %v540
    %748 = vmatprep.subr.bf16.mxu0 0
    %749 = vmatpush1.bf16.msra.mxu0 %v541
    %750 = vmatprep.subr.bf16.mxu0 0
    %751 = vmatpush1.bf16.msra.mxu0 %v542
    %752 = vmatprep.subr.bf16.mxu0 0
    %753 = vmatpush1.bf16.msra.mxu0 %v543
    %754 = vmatprep.subr.bf16.mxu0 0
    %755 = vmatpush1.bf16.msra.mxu0 %v544
    %756 = vmatprep.subr.bf16.mxu0 0
    %757 = vmatpush1.bf16.msra.mxu0 %v545
    %758 = vmatprep.subr.bf16.mxu0 0
    %759 = vmatpush1.bf16.msra.mxu0 %v546
    %760 = vmatprep.subr.bf16.mxu0 0
    %761 = vmatpush1.bf16.msra.mxu0 %v547
    %762 = vmatprep.subr.bf16.mxu0 0
    %763 = vmatpush1.bf16.msra.mxu0 %v548
    %764 = vmatprep.subr.bf16.mxu0 0
    %765 = vmatpush1.bf16.msra.mxu0 %v549
    %766 = vmatprep.mubr.bf16.mxu0 %v94
    %767 = vmatmul.mubr.bf16.gmra.mrb[0].mxu0 %v93
    %v768 = vpop.f32.mrb[0].mxu0
    %v769 = vadd.f32 %v729, %v768
    %v770 = vpop.f32.mrb[0].mxu0
    %v771 = vpop.f32.mrb[0].mxu0
    %v772 = vpop.f32.mrb[0].mxu0
    %773 = vdwg.mxu0
    %v774 = vlaneseq
    %v775 = vand.u32 %v774, 127
    %776 = vrot.lane.b32.xlu0 %v769, 127
    %v777 = vpop.permute.xlu0 %776
    %778 = vrot.lane.b32.xlu0 %v769, 1
    %v779 = vpop.permute.xlu0 %778
    %v780 = vand.u32 %v775, 1
    %vm781 = vcmp.eq.s32.totalorder %v780, 0
    %v782 = vsel %vm781, %v777, %v779
    %v783 = vmax.f32 %v769, %v782
    %784 = vrot.lane.b32.xlu0 %v783, 126
    %v785 = vpop.permute.xlu0 %784
    %786 = vrot.lane.b32.xlu0 %v783, 2
    %v787 = vpop.permute.xlu0 %786
    %v788 = vand.u32 %v775, 3
    %vm789 = vcmp.lt.s32.totalorder %v788, 2
    %v790 = vsel %vm789, %v785, %v787
    %v791 = vmax.f32 %v783, %v790
    %v792 = vsub.f32 %v769, %v791
    %v793 = vmul.f32 %v792, 1.442695
    %v794 = vpow.pop %v793
    %795 = vrot.lane.b32.xlu0 %v794, 127
    %v796 = vpop.permute.xlu0 %795
    %797 = vrot.lane.b32.xlu0 %v794, 1
    %v798 = vpop.permute.xlu0 %797
    %v799 = vsel %vm781, %v796, %v798
    %v800 = vadd.f32 %v794, %v799
    %801 = vrot.lane.b32.xlu0 %v800, 126
    %v802 = vpop.permute.xlu0 %801
    %803 = vrot.lane.b32.xlu0 %v800, 2
    %v804 = vpop.permute.xlu0 %803
    %v805 = vsel %vm789, %v802, %v804
    %v806 = vadd.f32 %v800, %v805
    %v807 = vlog2.pop %v806
    %v808 = vmul.f32 %v807, 0.6931472
    %v809 = vsub.f32 %v792, %v808
    %810 = vst [vmem:[%s3] sm:$0x3] %v809
    // Predicated region
    $region22: #{bert_multilabel_cls_head.1} parent=1 // pred_check
      _
    $region23: #{bert_multilabel_cls_head.1} parent=1 // pred_check_branch
      %812 = sbr.rel (0) target = $region25
    $region24: #{bert_multilabel_cls_head.1} parent=1 // pred_region
      _
    $region25: #{bert_multilabel_cls_head.1} parent=1 // pred_fallthru
      _
    // Predicated region
    $region26: #{bert_multilabel_cls_head.1} parent=1 // pred_check
      _
    $region27: #{bert_multilabel_cls_head.1} parent=1 // pred_check_branch
      %814 = sbr.rel (0) target = $region29
    $region28: #{bert_multilabel_cls_head.1} parent=1 // pred_region
      _
    $region29: #{bert_multilabel_cls_head.1} parent=1 // pred_fallthru
      _
    %815 = vsyncpa [#allocation3], 1
    %816 = vsyncpa [#allocation5], 1

</llo_original>
